<compile_context>
chip_gen: v7x
topology: tpu7x:2x2x1
jax: 0.10.0
libtpu: 0.0.40
codegen_flags: <defaults>
</compile_context>

<pallas_src>
import functools

import jax
import jax.numpy as jnp
from jax.experimental import pallas as pl
from jax.experimental.pallas import tpu as pltpu


def _mask_classifier_kernel(x_ref, w_ref, b_ref, o_ref):
    # logits^T = W @ x^T without materializing x^T: contract dim 1 (H) of both
    # operands.  Maps straight to the MXU (transposed-RHS matmul), f32 accum.
    logits = jax.lax.dot_general(
        w_ref[...], x_ref[...],
        dimension_numbers=(((1,), (1,)), ((), ())),
        preferred_element_type=jnp.float32,
    )                                            # (C, tm)
    logits = logits + b_ref[...]                 # (C, 1) lane-broadcast add (VPU)
    # Numerically stable LogSoftmax over the class axis (axis 0 = sublanes).
    m = jnp.max(logits, axis=0, keepdims=True)   # (1, tm)  sublane reduce (XLU)
    z = logits - m
    lse = jnp.log(jnp.sum(jnp.exp(z), axis=0, keepdims=True))
    o_ref[...] = (z - lse).astype(o_ref.dtype)


def _round_up(a, b):
    return (a + b - 1) // b * b


def _cdiv(a, b):
    return -(-a // b)


@functools.partial(jax.jit, static_argnames=("tile_m",))
def mask_based_classifier(x, weight, bias, *, tile_m=16384):
    """x: (B, S, H); weight: (C, H) as in torch.nn.Linear; bias: (C,)."""
    B, S, H = x.shape
    C = weight.shape[0]
    M = B * S

    # Row-tile selection (static Python ints):
    #   * >= 2048 rows/step: amortizes the ~0.35us fixed per-step overhead
    #     against the ~160 B/row this kernel moves (HBM/overhead bound).
    #   * target >= ~8 grid steps when M is large: the "parallel" axis then
    #     shards across both v7x TensorCores and each core keeps a few steps
    #     to pipeline prefetch against compute.
    #   * <= tile_m (default 16384 -> ~5 MiB double-buffered: safe under the
    #     16 MiB default scoped VMEM on v5e; v6e/v7x defaults are 32 MiB).
    #   * multiple of 128: the (C, tm) output block is lane-dense (unmasked vst).
    tm = _round_up(max(2048, _cdiv(M, 8)), 128)
    tm = min(tm, _round_up(tile_m, 128), _round_up(M, 128))
    grid_steps = _cdiv(M, tm)

    x2 = x.reshape(M, H)                      # metadata-only merge, no copy
    b2 = bias.reshape(C, 1).astype(jnp.float32)

    x_spec_kwargs = {}
    if grid_steps >= 4 and tm <= 4096:
        # Small tiles + many steps: a 3rd input buffer keeps the DMA engine
        # ahead of the very short compute body (costs only 128*tm extra bytes).
        x_spec_kwargs["pipeline_mode"] = pl.Buffered(3)

    # NOTE: weight (C, H) and bias are kept whole and VMEM-resident (constant
    # index maps).  For a real MLM head (H~768, C~30k) this would need a
    # C-tiled grid axis with an online logsumexp accumulator instead.
    out_t = pl.pallas_call(
        _mask_classifier_kernel,
        out_shape=jax.ShapeDtypeStruct((C, M), x.dtype),
        grid_spec=pltpu.PrefetchScalarGridSpec(
            num_scalar_prefetch=0,
            grid=(grid_steps,),
            in_specs=[
                pl.BlockSpec((tm, H), lambda i: (i, 0), **x_spec_kwargs),  # x rows
                pl.BlockSpec((C, H), lambda i: (0, 0)),   # full weight (resident)
                pl.BlockSpec((C, 1), lambda i: (0, 0)),   # full bias (resident)
            ],
            out_specs=pl.BlockSpec((C, tm), lambda i: (0, i)),  # lane-dense
        ),
        compiler_params=pltpu.CompilerParams(
            dimension_semantics=("parallel",),  # row tiles shard across TCs (v7x)
        ),
    )(x2, weight, b2)

    # Back to (B, S, C): small (C, M) -> (M, C) transpose in the wrapper (module
    # contract); see TODO(synk) above about consuming (C, M) directly.
    return out_t.T.reshape(B, S, C)


if __name__ == "__main__":
    # Small shapes consistent with the module: BERT hidden=32, num_class=8.
    B, S, H, C = 2, 8, 32, 8

    key = jax.random.PRNGKey(0)
    kx, kw, kb = jax.random.split(key, 3)
    x = jax.random.normal(kx, (B, S, H), dtype=jnp.float32)
    # Deterministic synthetic parameters (PyTorch Linear shapes: (C, H), (C,)).
    weight = jax.random.normal(kw, (C, H), dtype=jnp.float32) * 0.05
    bias = jax.random.normal(kb, (C,), dtype=jnp.float32) * 0.05

    out = jax.block_until_ready(mask_based_classifier(x, weight, bias))

    # Reference in plain JAX (same math as nn.Linear + LogSoftmax(dim=-1)).
    ref = jax.nn.log_softmax(jnp.einsum("bsh,ch->bsc", x, weight) + bias, axis=-1)
    assert out.shape == (B, S, C)
    assert jnp.allclose(out, ref, atol=1e-4, rtol=1e-4), "mismatch vs reference"

    print("KERNEL_OK")
</pallas_src>

<mosaic_0001>
module attributes {stable_mosaic.version = 11 : i64} {
  func.func @_mask_classifier_kernel(%arg0: i32, %arg1: memref<128x32xf32, #tpu.memory_space<vmem>>, %arg2: memref<8x32xf32, #tpu.memory_space<vmem>>, %arg3: memref<8x1xf32, #tpu.memory_space<vmem>>, %arg4: memref<8x128xf32, #tpu.memory_space<vmem>>) attributes {dimension_semantics = [#tpu.dimension_semantics<parallel>], iteration_bounds = array<i64: 1>, scalar_prefetch = 0 : i64, scratch_operands = 0 : i64, tpu.core_type = #tpu.core_type<tc>, window_params = [{transform_indices = @transform_0, window_bounds = array<i64: 128, 32>}, {pipeline_mode = #tpu.pipeline_mode<synchronous>, transform_indices = @transform_1, window_bounds = array<i64: 8, 32>}, {pipeline_mode = #tpu.pipeline_mode<synchronous>, transform_indices = @transform_2, window_bounds = array<i64: 8, 1>}, {transform_indices = @transform_3, window_bounds = array<i64: 8, 128>}]} {
    %c0 = arith.constant 0 : index
    %c0_0 = arith.constant 0 : index
    %0 = vector.load %arg2[%c0, %c0_0] : memref<8x32xf32, #tpu.memory_space<vmem>>, vector<8x32xf32>
    %c0_1 = arith.constant 0 : index
    %c0_2 = arith.constant 0 : index
    %1 = vector.load %arg1[%c0_1, %c0_2] : memref<128x32xf32, #tpu.memory_space<vmem>>, vector<128x32xf32>
    %cst = arith.constant dense<0.000000e+00> : vector<8x128xf32>
    %2 = tpu.matmul %0, %1, %cst {dimension_numbers = #tpu.dot_dimension_numbers<[1], [1], [0], [0], [0, 0, 1, 0], [], []>} : vector<8x32xf32>, vector<128x32xf32>, vector<8x128xf32> -> vector<8x128xf32>
    %c0_3 = arith.constant 0 : index
    %c0_4 = arith.constant 0 : index
    %3 = vector.load %arg3[%c0_3, %c0_4] : memref<8x1xf32, #tpu.memory_space<vmem>>, vector<8x1xf32>
    %4 = vector.broadcast %3 : vector<8x1xf32> to vector<8x128xf32>
    %5 = arith.addf %2, %4 : vector<8x128xf32>
    %cst_5 = arith.constant dense<0xFF800000> : vector<128xf32>
    %6 = vector.multi_reduction <maximumf>, %5, %cst_5 [0] : vector<8x128xf32> to vector<128xf32>
    %7 = vector.shape_cast %6 : vector<128xf32> to vector<1x128xf32>
    %8 = vector.broadcast %7 : vector<1x128xf32> to vector<8x128xf32>
    %9 = arith.subf %5, %8 : vector<8x128xf32>
    %10 = math.exp %9 : vector<8x128xf32>
    %cst_6 = arith.constant dense<0.000000e+00> : vector<128xf32>
    %11 = vector.multi_reduction <add>, %10, %cst_6 [0] : vector<8x128xf32> to vector<128xf32>
    %12 = vector.shape_cast %11 : vector<128xf32> to vector<1x128xf32>
    %13 = math.log %12 : vector<1x128xf32>
    %14 = vector.broadcast %13 : vector<1x128xf32> to vector<8x128xf32>
    %15 = arith.subf %9, %14 : vector<8x128xf32>
    %c0_7 = arith.constant 0 : index
    %c0_8 = arith.constant 0 : index
    %16 = vector.load %arg4[%c0_7, %c0_8] : memref<8x128xf32, #tpu.memory_space<vmem>>, vector<8x128xf32>
    tpu.vector_store %arg4[%c0_7, %c0_8], %15 {strides = array<i32>} : memref<8x128xf32, #tpu.memory_space<vmem>>, vector<8x128xf32>,
    return
  }
  func.func @transform_0(%arg0: i32) -> (i32, i32) {
    %c0_i32 = arith.constant 0 : i32
    %c0_i32_0 = arith.constant 0 : i32
    return %arg0, %c0_i32 : i32, i32
  }
  func.func @transform_1(%arg0: i32) -> (i32, i32) {
    %c0_i32 = arith.constant 0 : i32
    %c0_i32_0 = arith.constant 0 : i32
    %c0_i32_1 = arith.constant 0 : i32
    return %c0_i32, %c0_i32_0 : i32, i32
  }
  func.func @transform_2(%arg0: i32) -> (i32, i32) {
    %c0_i32 = arith.constant 0 : i32
    %c0_i32_0 = arith.constant 0 : i32
    %c0_i32_1 = arith.constant 0 : i32
    return %c0_i32, %c0_i32_0 : i32, i32
  }
  func.func @transform_3(%arg0: i32) -> (i32, i32) {
    %c0_i32 = arith.constant 0 : i32
    %c0_i32_0 = arith.constant 0 : i32
    return %c0_i32, %arg0 : i32, i32
  }
}

</mosaic_0001>

<llo_original>
// kernel: mask_based_classifier.1
$region0: #{mask_based_classifier.1}
  #allocation0 [shape = 'u32[]', space=smem, size = 0x4, offset = 0x4, fixed_abs, tag = 'smem constant byte address 0x4 - core index']
  #allocation1 [shape = 'u32[144,128]{1,0:T(1,128)}', space=vmem, size = 0x12000, scoped, tag = 'internal scratch']
  %s0 = inlined_call_operand.vmem [shape: f32[16,32], index: 0, kind: input, shape index: {}]
  %s1 = inlined_call_operand.hbm [shape: f32[8,32], index: 1, kind: input, shape index: {}]
  %s2 = inlined_call_operand.vmem [shape: f32[8,1], index: 2, kind: input, shape index: {}]
  %s3 = inlined_call_operand.vmem [shape: f32[8,16], index: 3, kind: output, shape index: {}]
  %s4 = sld [smem:[#allocation0]]
  $region26: #{mask_based_classifier.1} parent=0
    _
  %s6 = ssub.s32 1, %s4
  %s7 = scalar_select 0, %s6, %s4
  $region1: #{mask_based_classifier.1} parent=0
    #allocation2 [shape = 'u8[4096]{0}', space=vmem, size = 0x1000, scoped, tag = 'input window, operand 1, single buffered']
    #allocation3 [shape = 's32[1]{0}', space=sflag, size = 0x4, scoped, tag = 'scoped memory for mask_based_classifier.1']
    %8 = vsyncpa [#allocation3], 0
    // Predicated region
    $region2: #{mask_based_classifier.1} parent=1 // pred_check
      _
    $region3: #{mask_based_classifier.1} parent=1 // pred_check_branch
      %10 = sbr.rel (0) target = $region5
    $region4: #{mask_based_classifier.1} parent=1 // pred_region
      _
    $region5: #{mask_based_classifier.1} parent=1 // pred_fallthru
      _
    // Predicated region
    $region6: #{mask_based_classifier.1} parent=1 // pred_check
      _
    $region7: #{mask_based_classifier.1} parent=1 // pred_check_branch
      %12 = sbr.rel (0) target = $region9
    $region8: #{mask_based_classifier.1} parent=1 // pred_region
      %s14 = ssub.s32 128, 128
      %15 = vsyncadd [#allocation3], %s14
      %s17 = sshll.u32 [#allocation2], 4
      %s18 = int_to_ptr.vmem [resolvable:$true] %s17
      %20 = dma.hbm_to_vmem [thread:$0]  %s1, 128, %s18, [#allocation3]
    $region9: #{mask_based_classifier.1} parent=1 // pred_fallthru
      _
    // Predicated region
    $region10: #{mask_based_classifier.1} parent=1 // pred_check
      _
    $region11: #{mask_based_classifier.1} parent=1 // pred_check_branch
      %22 = sbr.rel (0) target = $region13
    $region12: #{mask_based_classifier.1} parent=1 // pred_region
      _
    $region13: #{mask_based_classifier.1} parent=1 // pred_fallthru
      _
    // Predicated region
    $region14: #{mask_based_classifier.1} parent=1 // pred_check
      _
    $region15: #{mask_based_classifier.1} parent=1 // pred_check_branch
      %24 = sbr.rel (0) target = $region17
    $region16: #{mask_based_classifier.1} parent=1 // pred_region
      %25 = dma.done [#allocation3], 128
    $region17: #{mask_based_classifier.1} parent=1 // pred_fallthru
      _
    %v26 = vld [vmem:[#allocation2] sm:$0xff]
    %v27 = vld [vmem:[%s0] sm:$0xff]
    %v28 = vld [vmem:[%s0 + $0x8] sm:$0xff]
    %v29 = vld [vmem:[%s0 + $0x10] sm:$0xff]
    %v30 = vld [vmem:[%s0 + $0x18] sm:$0xff]
    %v31 = vld [vmem:[%s0 + $0x20] sm:$0xff]
    %v32 = vld [vmem:[%s0 + $0x28] sm:$0xff]
    %v33 = vld [vmem:[%s0 + $0x30] sm:$0xff]
    %v34 = vld [vmem:[%s0 + $0x38] sm:$0xff]
    %v35 = vld [vmem:[%s0 + $0x40] sm:$0xff]
    %v36 = vld [vmem:[%s0 + $0x48] sm:$0xff]
    %v37 = vld [vmem:[%s0 + $0x50] sm:$0xff]
    %v38 = vld [vmem:[%s0 + $0x58] sm:$0xff]
    %v39 = vld [vmem:[%s0 + $0x60] sm:$0xff]
    %v40 = vld [vmem:[%s0 + $0x68] sm:$0xff]
    %v41 = vld [vmem:[%s0 + $0x70] sm:$0xff]
    %v42 = vld [vmem:[%s0 + $0x78] sm:$0xff]
    %v43 = vld [vmem:[%s2] sm:$0xff]
    %45 = vset.pattern.permute.xlu0 0
    %46 = vperm.xlu0 %45, %v43
    %v47 = vpop.permute.xlu0 %46
    %vm49 = vcmask 261120
    %v51 = vsel %vm49, %v26, 0
    %v54 = vsel %vm49, %v27, 0
    %v57 = vsel %vm49, %v28, 0
    %v60 = vsel %vm49, %v29, 0
    %v63 = vsel %vm49, %v30, 0
    %v66 = vsel %vm49, %v31, 0
    %v69 = vsel %vm49, %v32, 0
    %v72 = vsel %vm49, %v33, 0
    %v75 = vsel %vm49, %v34, 0
    %v78 = vsel %vm49, %v35, 0
    %v81 = vsel %vm49, %v36, 0
    %v84 = vsel %vm49, %v37, 0
    %v87 = vsel %vm49, %v38, 0
    %v90 = vsel %vm49, %v39, 0
    %v93 = vsel %vm49, %v40, 0
    %v96 = vsel %vm49, %v41, 0
    %v99 = vsel %vm49, %v42, 0
    %101 = vmatprep.subr.mxu0 0.0
    %102 = vmatpush1.xpose.msra.mxu0 %v54
    %103 = vmatprep.subr.mxu0 0.0
    %104 = vmatpush1.xpose.msra.mxu0 %v57
    %105 = vmatprep.subr.mxu0 0.0
    %106 = vmatpush1.xpose.msra.mxu0 %v60
    %107 = vmatprep.subr.mxu0 0.0
    %108 = vmatpush1.xpose.msra.mxu0 %v63
    %109 = vmatprep.subr.mxu0 0.0
    %110 = vmatpush1.xpose.msra.mxu0 %v66
    %111 = vmatprep.subr.mxu0 0.0
    %112 = vmatpush1.xpose.msra.mxu0 %v69
    %113 = vmatprep.subr.mxu0 0.0
    %114 = vmatpush1.xpose.msra.mxu0 %v72
    %115 = vmatprep.subr.mxu0 0.0
    %116 = vmatpush1.xpose.msra.mxu0 %v75
    %117 = vmatprep.subr.mxu0 0.0
    %118 = vmatpush1.xpose.msra.mxu0 %v78
    %119 = vmatprep.subr.mxu0 0.0
    %120 = vmatpush1.xpose.msra.mxu0 %v81
    %121 = vmatprep.subr.mxu0 0.0
    %122 = vmatpush1.xpose.msra.mxu0 %v84
    %123 = vmatprep.subr.mxu0 0.0
    %124 = vmatpush1.xpose.msra.mxu0 %v87
    %125 = vmatprep.subr.mxu0 0.0
    %126 = vmatpush1.xpose.msra.mxu0 %v90
    %127 = vmatprep.subr.mxu0 0.0
    %128 = vmatpush1.xpose.msra.mxu0 %v93
    %129 = vmatprep.subr.mxu0 0.0
    %130 = vmatpush1.xpose.msra.mxu0 %v96
    %131 = vmatprep.subr.mxu0 0.0
    %132 = vmatpush1.xpose.msra.mxu0 %v99
    %133 = vmatprep.subr.mxu0 0.0
    %134 = vmatpush1.xpose.msra.mxu0 0.0
    %135 = vmatprep.subr.mxu0 0.0
    %136 = vmatpush1.xpose.msra.mxu0 0.0
    %137 = vmatprep.subr.mxu0 0.0
    %138 = vmatpush1.xpose.msra.mxu0 0.0
    %139 = vmatprep.subr.mxu0 0.0
    %140 = vmatpush1.xpose.msra.mxu0 0.0
    %141 = vmatprep.subr.mxu0 0.0
    %142 = vmatpush1.xpose.msra.mxu0 0.0
    %143 = vmatprep.subr.mxu0 0.0
    %144 = vmatpush1.xpose.msra.mxu0 0.0
    %145 = vmatprep.subr.mxu0 0.0
    %146 = vmatpush1.xpose.msra.mxu0 0.0
    %147 = vmatprep.subr.mxu0 0.0
    %148 = vmatpush1.xpose.msra.mxu0 0.0
    %149 = vmatprep.subr.mxu0 0.0
    %150 = vmatpush1.xpose.msra.mxu0 0.0
    %151 = vmatprep.subr.mxu0 0.0
    %152 = vmatpush1.xpose.msra.mxu0 0.0
    %153 = vmatprep.subr.mxu0 0.0
    %154 = vmatpush1.xpose.msra.mxu0 0.0
    %155 = vmatprep.subr.mxu0 0.0
    %156 = vmatpush1.xpose.msra.mxu0 0.0
    %157 = vmatprep.subr.mxu0 0.0
    %158 = vmatpush1.xpose.msra.mxu0 0.0
    %159 = vmatprep.subr.mxu0 0.0
    %160 = vmatpush1.xpose.msra.mxu0 0.0
    %161 = vmatprep.subr.mxu0 0.0
    %162 = vmatpush1.xpose.msra.mxu0 0.0
    %163 = vmatprep.subr.mxu0 0.0
    %164 = vmatpush1.xpose.msra.mxu0 0.0
    %165 = vmatprep.mubr.f32.mxu0 0.0
    %166 = vmatmul.mubr.f32.gmra.mrb[0].mxu0 %v51
    %v167 = vpop.f32.mrb[0].mxu0
    %v168 = vadd.f32 %v47, %v167
    %v169 = vpop.f32.mrb[0].mxu0
    %170 = vdwg.mxu0
    %v171 = vrot.slane %v168, 4
    %v172 = vmax.f32 %v168, %v171
    %v173 = vrot.slane %v172, 2
    %v174 = vmax.f32 %v172, %v173
    %v175 = vrot.slane %v174, 1
    %v176 = vmax.f32 %v174, %v175
    %v177 = vsub.f32 %v168, %v176
    %v178 = vmul.f32 %v177, 1.442695
    %v179 = vpow.pop %v178
    %v180 = vrot.slane %v179, 4
    %v181 = vadd.f32 %v179, %v180
    %v182 = vrot.slane %v181, 2
    %v183 = vadd.f32 %v181, %v182
    %v184 = vrot.slane %v183, 1
    %v185 = vadd.f32 %v183, %v184
    %v186 = vlog2.pop %v185
    %v187 = vmul.f32 %v186, 0.6931472
    %v188 = vsub.f32 %v177, %v187
    %189 = vst [vmem:[%s3] sm:$0xff] %v188
    // Predicated region
    $region18: #{mask_based_classifier.1} parent=1 // pred_check
      _
    $region19: #{mask_based_classifier.1} parent=1 // pred_check_branch
      %191 = sbr.rel (0) target = $region21
    $region20: #{mask_based_classifier.1} parent=1 // pred_region
      _
    $region21: #{mask_based_classifier.1} parent=1 // pred_fallthru
      _
    // Predicated region
    $region22: #{mask_based_classifier.1} parent=1 // pred_check
      _
    $region23: #{mask_based_classifier.1} parent=1 // pred_check_branch
      %193 = sbr.rel (0) target = $region25
    $region24: #{mask_based_classifier.1} parent=1 // pred_region
      _
    $region25: #{mask_based_classifier.1} parent=1 // pred_fallthru
      _
    %194 = vsyncpa [#allocation3], 1

</llo_original>
